<compile_context>
chip_gen: v6e
topology: v6e:2x2x1
jax: 0.10.0
libtpu: 0.0.40
codegen_flags: <defaults>
</compile_context>

<pallas_src>
import functools

import numpy as np
import jax
import jax.numpy as jnp
from jax.experimental import pallas as pl
from jax.experimental.pallas import tpu as pltpu


def _cdiv(a, b):
    return (a + b - 1) // b


def _round_up(a, b):
    return _cdiv(a, b) * b


def _tpu_kind():
    try:
        return jax.devices()[0].device_kind.lower()
    except Exception:
        return ""


def _ls_ce_weight_kernel(preds_ref, target_ref, wt_ref, wcol_ref,
                         lse_out, wx_out, num_out, den_out,
                         lse_acc, wx_acc, num_acc, den_acc,
                         *, n_rows):
    s = pl.program_id(0)            # split index   ("parallel" -> v7x 2 TCs)
    i = pl.program_id(1)            # batch tile    ("arbitrary" -> carries accumulators)
    n_tiles = pl.num_programs(1)

    @pl.when(i == 0)
    def _init():
        lse_acc[...] = jnp.zeros_like(lse_acc)
        wx_acc[...] = jnp.zeros_like(wx_acc)
        num_acc[...] = jnp.zeros_like(num_acc)
        den_acc[...] = jnp.zeros_like(den_acc)

    x = preds_ref[...]                              # (tn, C), native dtype (bf16 stays bf16)
    t = target_ref[...]                             # (tn, 1) int32
    wt = wt_ref[...]                                # (tn, 1) f32 = weights[target] (hoisted)
    wcol = wcol_ref[...]                            # (C, 1) f32, VMEM-resident
    tn, c = x.shape

    # Global row ids -> mask padded tail rows and over-provisioned split tiles.
    row0 = (s * n_tiles + i) * tn
    rows = row0 + jax.lax.broadcasted_iota(jnp.int32, (tn, 1), 0)
    valid = rows < n_rows                           # (tn, 1) bool

    # Stable log-sum-exp; max in native dtype, single f32 cast of the tile.
    m = jnp.max(x, axis=-1, keepdims=True)
    xf = x.astype(jnp.float32)
    mf = m.astype(jnp.float32)
    lse = jnp.log(jnp.sum(jnp.exp(xf - mf), axis=-1, keepdims=True)) + mf   # (tn, 1)

    # Weighted row sum sum_c w_c * x[r,c] on the (otherwise idle) MXU.
    wx = jnp.dot(xf, wcol, preferred_element_type=jnp.float32)              # (tn, 1)

    # Target gather x[r, t_r] via masked select (no f32 one-hot, no weight gather).
    cls = jax.lax.broadcasted_iota(jnp.int32, (tn, c), 1)
    x_t = jnp.sum(jnp.where(cls == t, xf, 0.0), axis=-1, keepdims=True)     # (tn, 1)

    # nll_loss applied to the *already weighted* log-probs with weight=w again,
    # i.e. per-sample numerator = w_t^2 * (lse - x_t)  (matches the PyTorch quirk).
    nll_rows = (wt * wt) * (lse - x_t)

    lse_acc[...] += jnp.sum(jnp.where(valid, lse, 0.0), keepdims=True)
    wx_acc[...] += jnp.sum(jnp.where(valid, wx, 0.0), keepdims=True)
    num_acc[...] += jnp.sum(jnp.where(valid, nll_rows, 0.0), keepdims=True)
    den_acc[...] += jnp.sum(jnp.where(valid, wt, 0.0), keepdims=True)

    @pl.when(i == n_tiles - 1)
    def _flush():
        lse_out[...] = lse_acc[...]
        wx_out[...] = wx_acc[...]
        num_out[...] = num_acc[...]
        den_out[...] = den_acc[...]


def _single_loss(preds, target, weights, epsilon, tile_n, num_splits):
    n, c = preds.shape
    itemsize = jnp.dtype(preds.dtype).itemsize
    kind = _tpu_kind()
    is_v7 = "v7" in kind

    if num_splits is None:
        # Only v7x has 2 TensorCores per chip; single-TC chips gain nothing from
        # the split axis but pay for redundant clamped-tile DMAs.
        num_splits = 2 if is_v7 else 1
    num_splits = max(1, int(num_splits))

    # Per-buffer row cap / scoped-VMEM ceiling per generation:
    # v7x has 64 MiB physical VMEM (keep 4 MiB/buffer, 32 MiB limit); the 128 MiB
    # generations can afford larger tiles to amortize per-grid-step overhead.
    buf_cap = (4 << 20) if is_v7 else (8 << 20)
    vmem_ceiling = (32 << 20) if is_v7 else (64 << 20)

    SUB = 16                                   # sublane multiple safe for f32 & bf16
    cap_rows = max(SUB, buf_cap // max(1, c * itemsize))
    rows_per_split = _cdiv(n, num_splits)
    tn = min(int(tile_n), cap_rows, _round_up(rows_per_split, SUB))
    tn = max(SUB, (tn // SUB) * SUB)
    tiles_per_split = _cdiv(rows_per_split, tn)
    last_block = max(0, _cdiv(n, tn) - 1)      # clamp OOB split tiles (masked anyway)

    w_f32 = jnp.asarray(weights, jnp.float32).reshape(c)
    t_i32 = jnp.asarray(target, jnp.int32).reshape(n)
    t2 = t_i32.reshape(n, 1)
    # Hoisted per-row class-weight gather (N floats, negligible HBM traffic).
    wt = jnp.take(w_f32, t_i32, axis=0).reshape(n, 1)
    w_col = w_f32.reshape(c, 1)

    def row_map(s, i):
        return (jnp.minimum(s * tiles_per_split + i, last_block), 0)

    part_shape = jax.ShapeDtypeStruct((num_splits, 1, 1), jnp.float32)
    part_spec = pl.BlockSpec((None, 1, 1), lambda s, i: (s, 0, 0))

    vmem_need = (2 * tn * c * itemsize         # double-buffered preds tiles
                 + 4 * tn * 128 * 4            # target + w_t tiles (lane-padded)
                 + 2 * c * 4                   # resident weight column
                 + 256 * 1024)                 # scratch + partial outputs + slack
    compiler_params = pltpu.CompilerParams(
        dimension_semantics=("parallel", "arbitrary"),
        vmem_limit_bytes=int(min(vmem_ceiling, max(16 << 20, 4 * vmem_need))),
    )
    cost = pl.CostEstimate(
        flops=8 * n * c,
        transcendentals=n * c + 2 * n,
        bytes_accessed=n * c * itemsize + 2 * n * 4 + c * 4 + num_splits * 4 * 4,
    )

    lse_p, wx_p, num_p, den_p = pl.pallas_call(
        functools.partial(_ls_ce_weight_kernel, n_rows=n),
        grid=(num_splits, tiles_per_split),
        in_specs=[
            pl.BlockSpec((tn, c), row_map),               # preds (native dtype)
            pl.BlockSpec((tn, 1), row_map),               # target
            pl.BlockSpec((tn, 1), row_map),               # weights[target] (hoisted)
            pl.BlockSpec((c, 1), lambda s, i: (0, 0)),    # weight column (resident)
        ],
        out_specs=(part_spec, part_spec, part_spec, part_spec),
        out_shape=(part_shape, part_shape, part_shape, part_shape),
        scratch_shapes=[pltpu.VMEM((1, 1), jnp.float32)] * 4,
        compiler_params=compiler_params,
        cost_estimate=cost,
    )(preds, t2, wt, w_col)

    # Tiny epilogue in plain JAX: fold in the loop-invariant class-weight sum,
    # combine per-split partials, normalize.
    w_sum = jnp.sum(w_f32)
    smooth_sum = w_sum * jnp.sum(lse_p) - jnp.sum(wx_p)   # sum_r (-sum_c w_c*logp[r,c])
    loss = smooth_sum / n
    nll = jnp.sum(num_p) / jnp.sum(den_p)
    return epsilon * (loss / c) + (1.0 - epsilon) * nll


def label_smoothing_ce_weight(preds, target, weights=None, epsilon=0.1,
                              *, tile_n=512, num_splits=None):
    """LabelSmoothingCrossEntropyWeight.forward (reduction='mean').

    preds: (N, C) float array, or a list of such arrays (losses are averaged,
    like the PyTorch module). target: (N,) int. weights: (C,) float or None.
    num_splits=None picks 2 on v7x (2 TensorCores) and 1 elsewhere.
    """
    if isinstance(preds, (list, tuple)):
        losses = [label_smoothing_ce_weight(p, target, weights, epsilon,
                                            tile_n=tile_n, num_splits=num_splits)
                  for p in preds]
        return sum(losses) / len(losses)
    n, c = preds.shape
    if weights is None:
        weights = jnp.ones((c,), jnp.float32)   # same math as unweighted
    return _single_loss(preds, target, weights, float(epsilon), tile_n, num_splits)


def _make_class_weights(samplesize_per_cls, smoothing=False):
    """Deterministic re-implementation of the module's __init__ weight setup."""
    beta = 0.999
    effective_num = 1.0 - np.power(beta, samplesize_per_cls)
    w = (1.0 - beta) / np.array(effective_num)
    alpha = w / np.sum(w) * len(samplesize_per_cls)
    if smoothing:
        k = 1.0 / len(alpha)
        alpha = np.array([(x / np.sum(alpha) + k) / 2 for x in alpha])
    return jnp.asarray(alpha, jnp.float32)


def _reference(preds, target, weights, epsilon=0.1):
    """Pure-JAX reference mirroring the PyTorch forward (reduction='mean')."""
    n, c = preds.shape
    logp = jax.nn.log_softmax(preds.astype(jnp.float32), axis=-1)
    wlogp = weights[None, :] * logp
    loss = jnp.mean(-jnp.sum(wlogp, axis=-1))
    picked = wlogp[jnp.arange(n), target]
    w_t = weights[target]
    nll = jnp.sum(-w_t * picked) / jnp.sum(w_t)
    return epsilon * (loss / c) + (1.0 - epsilon) * nll


if __name__ == "__main__":
    N, C = 16, 8
    key = jax.random.PRNGKey(0)
    k_preds, k_tgt = jax.random.split(key)

    preds = jax.random.normal(k_preds, (N, C), dtype=jnp.float32)
    target = jax.random.randint(k_tgt, (N,), 0, C, dtype=jnp.int32)

    samplesize_per_cls = np.array([100, 200, 50, 400, 25, 300, 150, 75], np.float64)
    weights = _make_class_weights(samplesize_per_cls, smoothing=False)

    # Main case.
    out = jax.block_until_ready(label_smoothing_ce_weight(preds, target, weights))
    ref = _reference(preds, target, weights)
    np.testing.assert_allclose(np.asarray(out), np.asarray(ref), rtol=1e-5, atol=1e-5)

    # Partial-tile / masking path (N not a multiple of tile or split count).
    out13 = jax.block_until_ready(
        label_smoothing_ce_weight(preds[:13], target[:13], weights))
    ref13 = _reference(preds[:13], target[:13], weights)
    np.testing.assert_allclose(np.asarray(out13), np.asarray(ref13), rtol=1e-5, atol=1e-5)

    # Explicit 2-split path (exercises the "parallel" axis + clamped-tile masking).
    out_sp = jax.block_until_ready(
        label_smoothing_ce_weight(preds, target, weights, num_splits=2))
    np.testing.assert_allclose(np.asarray(out_sp), np.asarray(ref), rtol=1e-5, atol=1e-5)

    # Native-bf16 inputs: no wrapper-side f32 cast, kernel casts once in-register.
    preds_bf16 = preds.astype(jnp.bfloat16)
    out_bf = jax.block_until_ready(label_smoothing_ce_weight(preds_bf16, target, weights))
    ref_bf = _reference(preds_bf16, target, weights)
    np.testing.assert_allclose(np.asarray(out_bf), np.asarray(ref_bf), rtol=1e-4, atol=1e-4)

    # weights=None path (plain label-smoothed CE).
    out_nw = jax.block_until_ready(label_smoothing_ce_weight(preds, target, None))
    ref_nw = _reference(preds, target, jnp.ones((C,), jnp.float32))
    np.testing.assert_allclose(np.asarray(out_nw), np.asarray(ref_nw), rtol=1e-5, atol=1e-5)

    print("KERNEL_OK")
</pallas_src>

<mosaic_0001>
module attributes {stable_mosaic.version = 11 : i64} {
  func.func @_ls_ce_weight_kernel(%arg0: i32, %arg1: i32, %arg2: memref<16x8xf32, #tpu.memory_space<vmem>>, %arg3: memref<16x1xi32, #tpu.memory_space<vmem>>, %arg4: memref<16x1xf32, #tpu.memory_space<vmem>>, %arg5: memref<8x1xf32, #tpu.memory_space<vmem>>, %arg6: memref<1x1x1xf32, #tpu.memory_space<vmem>>, %arg7: memref<1x1x1xf32, #tpu.memory_space<vmem>>, %arg8: memref<1x1x1xf32, #tpu.memory_space<vmem>>, %arg9: memref<1x1x1xf32, #tpu.memory_space<vmem>>, %arg10: memref<1x1xf32, #tpu.memory_space<vmem>>, %arg11: memref<1x1xf32, #tpu.memory_space<vmem>>, %arg12: memref<1x1xf32, #tpu.memory_space<vmem>>, %arg13: memref<1x1xf32, #tpu.memory_space<vmem>>) attributes {dimension_semantics = [#tpu.dimension_semantics<parallel>, #tpu.dimension_semantics<arbitrary>], iteration_bounds = array<i64: 1, 1>, scalar_prefetch = 0 : i64, scratch_operands = 4 : i64, tpu.core_type = #tpu.core_type<tc>, window_params = [{transform_indices = @transform_0, window_bounds = array<i64: 16, 8>}, {transform_indices = @transform_1, window_bounds = array<i64: 16, 1>}, {transform_indices = @transform_2, window_bounds = array<i64: 16, 1>}, {pipeline_mode = #tpu.pipeline_mode<synchronous>, transform_indices = @transform_3, window_bounds = array<i64: 8, 1>}, {transform_indices = @transform_4, window_bounds = array<i64: 1, 1, 1>}, {transform_indices = @transform_5, window_bounds = array<i64: 1, 1, 1>}, {transform_indices = @transform_6, window_bounds = array<i64: 1, 1, 1>}, {transform_indices = @transform_7, window_bounds = array<i64: 1, 1, 1>}]} {
    %c0_i32 = arith.constant 0 : i32
    %0 = arith.cmpi eq, %arg1, %c0_i32 : i32
    %1 = arith.extui %0 : i1 to i32
    %c0_i32_0 = arith.constant 0 : i32
    %2 = arith.cmpi ne, %1, %c0_i32_0 : i32
    scf.if %2 {
      %cst_39 = arith.constant 0.000000e+00 : f32
      %78 = vector.broadcast %cst_39 : f32 to vector<1x1xf32>
      %c0_40 = arith.constant 0 : index
      %c0_41 = arith.constant 0 : index
      %79 = vector.load %arg10[%c0_40, %c0_41] : memref<1x1xf32, #tpu.memory_space<vmem>>, vector<1x1xf32>
      tpu.vector_store %arg10[%c0_40, %c0_41], %78 {strides = array<i32>} : memref<1x1xf32, #tpu.memory_space<vmem>>, vector<1x1xf32>,
      %cst_42 = arith.constant 0.000000e+00 : f32
      %80 = vector.broadcast %cst_42 : f32 to vector<1x1xf32>
      %c0_43 = arith.constant 0 : index
      %c0_44 = arith.constant 0 : index
      %81 = vector.load %arg11[%c0_43, %c0_44] : memref<1x1xf32, #tpu.memory_space<vmem>>, vector<1x1xf32>
      tpu.vector_store %arg11[%c0_43, %c0_44], %80 {strides = array<i32>} : memref<1x1xf32, #tpu.memory_space<vmem>>, vector<1x1xf32>,
      %cst_45 = arith.constant 0.000000e+00 : f32
      %82 = vector.broadcast %cst_45 : f32 to vector<1x1xf32>
      %c0_46 = arith.constant 0 : index
      %c0_47 = arith.constant 0 : index
      %83 = vector.load %arg12[%c0_46, %c0_47] : memref<1x1xf32, #tpu.memory_space<vmem>>, vector<1x1xf32>
      tpu.vector_store %arg12[%c0_46, %c0_47], %82 {strides = array<i32>} : memref<1x1xf32, #tpu.memory_space<vmem>>, vector<1x1xf32>,
      %cst_48 = arith.constant 0.000000e+00 : f32
      %84 = vector.broadcast %cst_48 : f32 to vector<1x1xf32>
      %c0_49 = arith.constant 0 : index
      %c0_50 = arith.constant 0 : index
      %85 = vector.load %arg13[%c0_49, %c0_50] : memref<1x1xf32, #tpu.memory_space<vmem>>, vector<1x1xf32>
      tpu.vector_store %arg13[%c0_49, %c0_50], %84 {strides = array<i32>} : memref<1x1xf32, #tpu.memory_space<vmem>>, vector<1x1xf32>,
    } else {
    }
    %c0 = arith.constant 0 : index
    %c0_1 = arith.constant 0 : index
    %3 = vector.load %arg2[%c0, %c0_1] : memref<16x8xf32, #tpu.memory_space<vmem>>, vector<16x8xf32>
    %c0_2 = arith.constant 0 : index
    %c0_3 = arith.constant 0 : index
    %4 = vector.load %arg3[%c0_2, %c0_3] : memref<16x1xi32, #tpu.memory_space<vmem>>, vector<16x1xi32>
    %c0_4 = arith.constant 0 : index
    %c0_5 = arith.constant 0 : index
    %5 = vector.load %arg4[%c0_4, %c0_5] : memref<16x1xf32, #tpu.memory_space<vmem>>, vector<16x1xf32>
    %c0_6 = arith.constant 0 : index
    %c0_7 = arith.constant 0 : index
    %6 = vector.load %arg5[%c0_6, %c0_7] : memref<8x1xf32, #tpu.memory_space<vmem>>, vector<8x1xf32>
    %c1_i32 = arith.constant 1 : i32
    %7 = arith.muli %arg0, %c1_i32 : i32
    %8 = arith.addi %7, %arg1 : i32
    %c16_i32 = arith.constant 16 : i32
    %9 = arith.muli %8, %c16_i32 : i32
    %10 = tpu.iota {dimensions = array<i32: 0>} : vector<16x1xi32>
    %11 = vector.broadcast %9 : i32 to vector<16x1xi32>
    %12 = arith.addi %11, %10 : vector<16x1xi32>
    %c16_i32_8 = arith.constant 16 : i32
    %13 = vector.broadcast %c16_i32_8 : i32 to vector<16x1xi32>
    %14 = arith.cmpi slt, %12, %13 : vector<16x1xi32>
    %cst = arith.constant dense<0xFF800000> : vector<16xf32>
    %15 = vector.multi_reduction <maximumf>, %3, %cst [1] : vector<16x8xf32> to vector<16xf32>
    %16 = vector.shape_cast %15 : vector<16xf32> to vector<16x1xf32>
    %17 = vector.broadcast %16 : vector<16x1xf32> to vector<16x8xf32>
    %18 = arith.subf %3, %17 : vector<16x8xf32>
    %19 = math.exp %18 : vector<16x8xf32>
    %cst_9 = arith.constant dense<0.000000e+00> : vector<16xf32>
    %20 = vector.multi_reduction <add>, %19, %cst_9 [1] : vector<16x8xf32> to vector<16xf32>
    %21 = vector.shape_cast %20 : vector<16xf32> to vector<16x1xf32>
    %22 = math.log %21 : vector<16x1xf32>
    %23 = arith.addf %22, %16 : vector<16x1xf32>
    %cst_10 = arith.constant dense<0.000000e+00> : vector<16x1xf32>
    %24 = tpu.matmul %3, %6, %cst_10 {dimension_numbers = #tpu.dot_dimension_numbers<[1], [0], [0], [1], [0, 0, 1, 1], [], []>} : vector<16x8xf32>, vector<8x1xf32>, vector<16x1xf32> -> vector<16x1xf32>
    %25 = tpu.iota {dimensions = array<i32: 1>} : vector<16x8xi32>
    %26 = vector.broadcast %4 : vector<16x1xi32> to vector<16x8xi32>
    %27 = arith.cmpi eq, %25, %26 : vector<16x8xi32>
    %cst_11 = arith.constant 0.000000e+00 : f32
    %28 = vector.broadcast %cst_11 : f32 to vector<16x8xf32>
    %29 = arith.select %27, %3, %28 : vector<16x8xi1>, vector<16x8xf32>
    %cst_12 = arith.constant dense<0.000000e+00> : vector<16xf32>
    %30 = vector.multi_reduction <add>, %29, %cst_12 [1] : vector<16x8xf32> to vector<16xf32>
    %31 = vector.shape_cast %30 : vector<16xf32> to vector<16x1xf32>
    %32 = arith.mulf %5, %5 : vector<16x1xf32>
    %33 = arith.subf %23, %31 : vector<16x1xf32>
    %34 = arith.mulf %32, %33 : vector<16x1xf32>
    %c0_13 = arith.constant 0 : index
    %c0_14 = arith.constant 0 : index
    %35 = vector.load %arg10[%c0_13, %c0_14] : memref<1x1xf32, #tpu.memory_space<vmem>>, vector<1x1xf32>
    %cst_15 = arith.constant 0.000000e+00 : f32
    %36 = vector.broadcast %cst_15 : f32 to vector<16x1xf32>
    %37 = arith.select %14, %23, %36 : vector<16x1xi1>, vector<16x1xf32>
    %38 = vector.shape_cast %37 : vector<16x1xf32> to vector<1x16x1xf32>
    %cst_16 = arith.constant dense<0.000000e+00> : vector<1xf32>
    %39 = vector.multi_reduction <add>, %38, %cst_16 [1, 2] : vector<1x16x1xf32> to vector<1xf32>
    %40 = vector.shape_cast %39 : vector<1xf32> to vector<1x1x1xf32>
    %41 = vector.extract %40[0, 0, 0] : f32 from vector<1x1x1xf32>
    %42 = vector.broadcast %41 : f32 to vector<1x1xf32>
    %43 = arith.addf %35, %42 : vector<1x1xf32>
    %c0_17 = arith.constant 0 : index
    %c0_18 = arith.constant 0 : index
    %44 = vector.load %arg10[%c0_17, %c0_18] : memref<1x1xf32, #tpu.memory_space<vmem>>, vector<1x1xf32>
    tpu.vector_store %arg10[%c0_17, %c0_18], %43 {strides = array<i32>} : memref<1x1xf32, #tpu.memory_space<vmem>>, vector<1x1xf32>,
    %c0_19 = arith.constant 0 : index
    %c0_20 = arith.constant 0 : index
    %45 = vector.load %arg11[%c0_19, %c0_20] : memref<1x1xf32, #tpu.memory_space<vmem>>, vector<1x1xf32>
    %cst_21 = arith.constant 0.000000e+00 : f32
    %46 = vector.broadcast %cst_21 : f32 to vector<16x1xf32>
    %47 = arith.select %14, %24, %46 : vector<16x1xi1>, vector<16x1xf32>
    %48 = vector.shape_cast %47 : vector<16x1xf32> to vector<1x16x1xf32>
    %cst_22 = arith.constant dense<0.000000e+00> : vector<1xf32>
    %49 = vector.multi_reduction <add>, %48, %cst_22 [1, 2] : vector<1x16x1xf32> to vector<1xf32>
    %50 = vector.shape_cast %49 : vector<1xf32> to vector<1x1x1xf32>
    %51 = vector.extract %50[0, 0, 0] : f32 from vector<1x1x1xf32>
    %52 = vector.broadcast %51 : f32 to vector<1x1xf32>
    %53 = arith.addf %45, %52 : vector<1x1xf32>
    %c0_23 = arith.constant 0 : index
    %c0_24 = arith.constant 0 : index
    %54 = vector.load %arg11[%c0_23, %c0_24] : memref<1x1xf32, #tpu.memory_space<vmem>>, vector<1x1xf32>
    tpu.vector_store %arg11[%c0_23, %c0_24], %53 {strides = array<i32>} : memref<1x1xf32, #tpu.memory_space<vmem>>, vector<1x1xf32>,
    %c0_25 = arith.constant 0 : index
    %c0_26 = arith.constant 0 : index
    %55 = vector.load %arg12[%c0_25, %c0_26] : memref<1x1xf32, #tpu.memory_space<vmem>>, vector<1x1xf32>
    %cst_27 = arith.constant 0.000000e+00 : f32
    %56 = vector.broadcast %cst_27 : f32 to vector<16x1xf32>
    %57 = arith.select %14, %34, %56 : vector<16x1xi1>, vector<16x1xf32>
    %58 = vector.shape_cast %57 : vector<16x1xf32> to vector<1x16x1xf32>
    %cst_28 = arith.constant dense<0.000000e+00> : vector<1xf32>
    %59 = vector.multi_reduction <add>, %58, %cst_28 [1, 2] : vector<1x16x1xf32> to vector<1xf32>
    %60 = vector.shape_cast %59 : vector<1xf32> to vector<1x1x1xf32>
    %61 = vector.extract %60[0, 0, 0] : f32 from vector<1x1x1xf32>
    %62 = vector.broadcast %61 : f32 to vector<1x1xf32>
    %63 = arith.addf %55, %62 : vector<1x1xf32>
    %c0_29 = arith.constant 0 : index
    %c0_30 = arith.constant 0 : index
    %64 = vector.load %arg12[%c0_29, %c0_30] : memref<1x1xf32, #tpu.memory_space<vmem>>, vector<1x1xf32>
    tpu.vector_store %arg12[%c0_29, %c0_30], %63 {strides = array<i32>} : memref<1x1xf32, #tpu.memory_space<vmem>>, vector<1x1xf32>,
    %c0_31 = arith.constant 0 : index
    %c0_32 = arith.constant 0 : index
    %65 = vector.load %arg13[%c0_31, %c0_32] : memref<1x1xf32, #tpu.memory_space<vmem>>, vector<1x1xf32>
    %cst_33 = arith.constant 0.000000e+00 : f32
    %66 = vector.broadcast %cst_33 : f32 to vector<16x1xf32>
    %67 = arith.select %14, %5, %66 : vector<16x1xi1>, vector<16x1xf32>
    %68 = vector.shape_cast %67 : vector<16x1xf32> to vector<1x16x1xf32>
    %cst_34 = arith.constant dense<0.000000e+00> : vector<1xf32>
    %69 = vector.multi_reduction <add>, %68, %cst_34 [1, 2] : vector<1x16x1xf32> to vector<1xf32>
    %70 = vector.shape_cast %69 : vector<1xf32> to vector<1x1x1xf32>
    %71 = vector.extract %70[0, 0, 0] : f32 from vector<1x1x1xf32>
    %72 = vector.broadcast %71 : f32 to vector<1x1xf32>
    %73 = arith.addf %65, %72 : vector<1x1xf32>
    %c0_35 = arith.constant 0 : index
    %c0_36 = arith.constant 0 : index
    %74 = vector.load %arg13[%c0_35, %c0_36] : memref<1x1xf32, #tpu.memory_space<vmem>>, vector<1x1xf32>
    tpu.vector_store %arg13[%c0_35, %c0_36], %73 {strides = array<i32>} : memref<1x1xf32, #tpu.memory_space<vmem>>, vector<1x1xf32>,
    %c0_i32_37 = arith.constant 0 : i32
    %75 = arith.cmpi eq, %arg1, %c0_i32_37 : i32
    %76 = arith.extui %75 : i1 to i32
    %c0_i32_38 = arith.constant 0 : i32
    %77 = arith.cmpi ne, %76, %c0_i32_38 : i32
    scf.if %77 {
      %c0_39 = arith.constant 0 : index
      %c0_40 = arith.constant 0 : index
      %78 = vector.load %arg10[%c0_39, %c0_40] : memref<1x1xf32, #tpu.memory_space<vmem>>, vector<1x1xf32>
      %c0_41 = arith.constant 0 : index
      %c0_42 = arith.constant 0 : index
      %c0_43 = arith.constant 0 : index
      %79 = vector.load %arg6[%c0_41, %c0_42, %c0_43] : memref<1x1x1xf32, #tpu.memory_space<vmem>>, vector<1x1x1xf32>
      %80 = vector.shape_cast %79 : vector<1x1x1xf32> to vector<1x1xf32>
      %81 = vector.shape_cast %78 : vector<1x1xf32> to vector<1x1x1xf32>
      tpu.vector_store %arg6[%c0_41, %c0_42, %c0_43], %81 {strides = array<i32>} : memref<1x1x1xf32, #tpu.memory_space<vmem>>, vector<1x1x1xf32>,
      %c0_44 = arith.constant 0 : index
      %c0_45 = arith.constant 0 : index
      %82 = vector.load %arg11[%c0_44, %c0_45] : memref<1x1xf32, #tpu.memory_space<vmem>>, vector<1x1xf32>
      %c0_46 = arith.constant 0 : index
      %c0_47 = arith.constant 0 : index
      %c0_48 = arith.constant 0 : index
      %83 = vector.load %arg7[%c0_46, %c0_47, %c0_48] : memref<1x1x1xf32, #tpu.memory_space<vmem>>, vector<1x1x1xf32>
      %84 = vector.shape_cast %83 : vector<1x1x1xf32> to vector<1x1xf32>
      %85 = vector.shape_cast %82 : vector<1x1xf32> to vector<1x1x1xf32>
      tpu.vector_store %arg7[%c0_46, %c0_47, %c0_48], %85 {strides = array<i32>} : memref<1x1x1xf32, #tpu.memory_space<vmem>>, vector<1x1x1xf32>,
      %c0_49 = arith.constant 0 : index
      %c0_50 = arith.constant 0 : index
      %86 = vector.load %arg12[%c0_49, %c0_50] : memref<1x1xf32, #tpu.memory_space<vmem>>, vector<1x1xf32>
      %c0_51 = arith.constant 0 : index
      %c0_52 = arith.constant 0 : index
      %c0_53 = arith.constant 0 : index
      %87 = vector.load %arg8[%c0_51, %c0_52, %c0_53] : memref<1x1x1xf32, #tpu.memory_space<vmem>>, vector<1x1x1xf32>
      %88 = vector.shape_cast %87 : vector<1x1x1xf32> to vector<1x1xf32>
      %89 = vector.shape_cast %86 : vector<1x1xf32> to vector<1x1x1xf32>
      tpu.vector_store %arg8[%c0_51, %c0_52, %c0_53], %89 {strides = array<i32>} : memref<1x1x1xf32, #tpu.memory_space<vmem>>, vector<1x1x1xf32>,
      %c0_54 = arith.constant 0 : index
      %c0_55 = arith.constant 0 : index
      %90 = vector.load %arg13[%c0_54, %c0_55] : memref<1x1xf32, #tpu.memory_space<vmem>>, vector<1x1xf32>
      %c0_56 = arith.constant 0 : index
      %c0_57 = arith.constant 0 : index
      %c0_58 = arith.constant 0 : index
      %91 = vector.load %arg9[%c0_56, %c0_57, %c0_58] : memref<1x1x1xf32, #tpu.memory_space<vmem>>, vector<1x1x1xf32>
      %92 = vector.shape_cast %91 : vector<1x1x1xf32> to vector<1x1xf32>
      %93 = vector.shape_cast %90 : vector<1x1xf32> to vector<1x1x1xf32>
      tpu.vector_store %arg9[%c0_56, %c0_57, %c0_58], %93 {strides = array<i32>} : memref<1x1x1xf32, #tpu.memory_space<vmem>>, vector<1x1x1xf32>,
    } else {
    }
    return
  }
  func.func @transform_0(%arg0: i32, %arg1: i32) -> (i32, i32) {
    %c1_i32 = arith.constant 1 : i32
    %0 = arith.muli %arg0, %c1_i32 : i32
    %1 = arith.addi %0, %arg1 : i32
    %c0_i32 = arith.constant 0 : i32
    %2 = arith.minsi %1, %c0_i32 : i32
    %c0_i32_0 = arith.constant 0 : i32
    %c0_i32_1 = arith.constant 0 : i32
    return %2, %c0_i32_0 : i32, i32
  }
  func.func @transform_1(%arg0: i32, %arg1: i32) -> (i32, i32) {
    %c1_i32 = arith.constant 1 : i32
    %0 = arith.muli %arg0, %c1_i32 : i32
    %1 = arith.addi %0, %arg1 : i32
    %c0_i32 = arith.constant 0 : i32
    %2 = arith.minsi %1, %c0_i32 : i32
    %c0_i32_0 = arith.constant 0 : i32
    %c0_i32_1 = arith.constant 0 : i32
    return %2, %c0_i32_0 : i32, i32
  }
  func.func @transform_2(%arg0: i32, %arg1: i32) -> (i32, i32) {
    %c1_i32 = arith.constant 1 : i32
    %0 = arith.muli %arg0, %c1_i32 : i32
    %1 = arith.addi %0, %arg1 : i32
    %c0_i32 = arith.constant 0 : i32
    %2 = arith.minsi %1, %c0_i32 : i32
    %c0_i32_0 = arith.constant 0 : i32
    %c0_i32_1 = arith.constant 0 : i32
    return %2, %c0_i32_0 : i32, i32
  }
  func.func @transform_3(%arg0: i32, %arg1: i32) -> (i32, i32) {
    %c0_i32 = arith.constant 0 : i32
    %c0_i32_0 = arith.constant 0 : i32
    %c0_i32_1 = arith.constant 0 : i32
    return %c0_i32, %c0_i32_0 : i32, i32
  }
  func.func @transform_4(%arg0: i32, %arg1: i32) -> (i32, i32, i32) {
    %c0_i32 = arith.constant 0 : i32
    %c0_i32_0 = arith.constant 0 : i32
    %c0_i32_1 = arith.constant 0 : i32
    return %arg0, %c0_i32, %c0_i32_0 : i32, i32, i32
  }
  func.func @transform_5(%arg0: i32, %arg1: i32) -> (i32, i32, i32) {
    %c0_i32 = arith.constant 0 : i32
    %c0_i32_0 = arith.constant 0 : i32
    %c0_i32_1 = arith.constant 0 : i32
    return %arg0, %c0_i32, %c0_i32_0 : i32, i32, i32
  }
  func.func @transform_6(%arg0: i32, %arg1: i32) -> (i32, i32, i32) {
    %c0_i32 = arith.constant 0 : i32
    %c0_i32_0 = arith.constant 0 : i32
    %c0_i32_1 = arith.constant 0 : i32
    return %arg0, %c0_i32, %c0_i32_0 : i32, i32, i32
  }
  func.func @transform_7(%arg0: i32, %arg1: i32) -> (i32, i32, i32) {
    %c0_i32 = arith.constant 0 : i32
    %c0_i32_0 = arith.constant 0 : i32
    %c0_i32_1 = arith.constant 0 : i32
    return %arg0, %c0_i32, %c0_i32_0 : i32, i32, i32
  }
}

</mosaic_0001>

<llo_original>
// kernel: tpu_custom_call.1
$region0: #{tpu_custom_call.1}
  #allocation0 [shape = 'u32[]', space=smem, size = 0x4, offset = 0x4, fixed_abs, tag = 'smem constant byte address 0x4 - core index']
  #allocation1 [shape = 'u32[144,128]{1,0:T(1,128)}', space=vmem, size = 0x12000, scoped, tag = 'internal scratch']
  #allocation2 [shape = 'f32[1,1]{1,0:T(1,128)}', space=vmem, size = 0x200, scoped, tag = 'scratch operand']
  #allocation3 [shape = 'f32[1,1]{1,0:T(1,128)}', space=vmem, size = 0x200, scoped, tag = 'scratch operand']
  #allocation4 [shape = 'f32[1,1]{1,0:T(1,128)}', space=vmem, size = 0x200, scoped, tag = 'scratch operand']
  #allocation5 [shape = 'f32[1,1]{1,0:T(1,128)}', space=vmem, size = 0x200, scoped, tag = 'scratch operand']
  %s0 = inlined_call_operand.vmem [shape: f32[16,8], index: 0, kind: input, shape index: {}]
  %s1 = inlined_call_operand.vmem [shape: s32[16,1], index: 1, kind: input, shape index: {}]
  %s2 = inlined_call_operand.vmem [shape: f32[16,1], index: 2, kind: input, shape index: {}]
  %s3 = inlined_call_operand.vmem [shape: f32[8,1], index: 3, kind: input, shape index: {}]
  %s4 = inlined_call_operand.hbm [shape: f32[1,1,1], index: 4, kind: output, shape index: {0}]
  %s5 = inlined_call_operand.hbm [shape: f32[1,1,1], index: 5, kind: output, shape index: {1}]
  %s6 = inlined_call_operand.hbm [shape: f32[1,1,1], index: 6, kind: output, shape index: {2}]
  %s7 = inlined_call_operand.hbm [shape: f32[1,1,1], index: 7, kind: output, shape index: {3}]
  %8 = xla_tuple %s4, %s5, %s6, %s7
  %s9 = sld [smem:[#allocation0]]
  $region58: #{tpu_custom_call.1} parent=0
    _
  %s11 = ssub.s32 1, %s9
  %s12 = scalar_select 0, %s11, %s9
  $region1: #{tpu_custom_call.1} parent=0
    #allocation6 [shape = 'u8[512]{0}', space=vmem, size = 0x400, scoped, tag = 'output window, operand 0, single buffered']
    #allocation7 [shape = 's32[1]{0}', space=sflag, size = 0x4, scoped, tag = 'scoped memory for tpu_custom_call.1']
    #allocation8 [shape = 'u8[512]{0}', space=vmem, size = 0x400, scoped, tag = 'output window, operand 1, single buffered']
    #allocation9 [shape = 's32[1]{0}', space=sflag, size = 0x4, scoped, tag = 'scoped memory for tpu_custom_call.1']
    #allocation10 [shape = 'u8[512]{0}', space=vmem, size = 0x400, scoped, tag = 'output window, operand 2, single buffered']
    #allocation11 [shape = 'u8[512]{0}', space=vmem, size = 0x400, scoped, tag = 'output window, operand 3, single buffered']
    #allocation12 [shape = 's32[1]{0}', space=sflag, size = 0x4, scoped, tag = 'scoped memory for tpu_custom_call.1']
    %13 = vsyncpa [#allocation7], 0
    %14 = vsyncpa [#allocation9], 0
    %15 = vsyncpa [#allocation12], 0
    // Predicated region
    $region2: #{tpu_custom_call.1} parent=1 // pred_check
      _
    $region3: #{tpu_custom_call.1} parent=1 // pred_check_branch
      %17 = sbr.rel (0) target = $region5
    $region4: #{tpu_custom_call.1} parent=1 // pred_region
      %s18 = sadd.s32 0, 0
      %p19 = scmp.lt.s32.totalorder %s18, 0
      %s20 = scalar_select %p19, %s18, 0
      %s21 = smul.u32 2, %s20
      %p22 = scmp.lt.s32.totalorder %s21, 1
      %s23 = scalar_select %p22, %s21, 1
      %s24 = smul.addr %s23, 8
      %s25 = scalar_lea.vmem %s0, %s24
      %s26 = sadd.s32 0, 0
      %p27 = scmp.lt.s32.totalorder %s26, 0
      %s28 = scalar_select %p27, %s26, 0
      %s29 = smul.u32 2, %s28
    $region5: #{tpu_custom_call.1} parent=1 // pred_fallthru
      _
    // Predicated region
    $region6: #{tpu_custom_call.1} parent=1 // pred_check
      _
    $region7: #{tpu_custom_call.1} parent=1 // pred_check_branch
      %31 = sbr.rel (0) target = $region9
    $region8: #{tpu_custom_call.1} parent=1 // pred_region
      %s32 = sadd.s32 0, 0
      %p33 = scmp.lt.s32.totalorder %s32, 0
      %s34 = scalar_select %p33, %s32, 0
      %s35 = smul.u32 2, %s34
      %p36 = scmp.lt.s32.totalorder %s35, 1
      %s37 = scalar_select %p36, %s35, 1
      %s38 = smul.addr %s37, 8
      %s39 = scalar_lea.vmem %s1, %s38
      %s40 = sadd.s32 0, 0
      %p41 = scmp.lt.s32.totalorder %s40, 0
      %s42 = scalar_select %p41, %s40, 0
      %s43 = smul.u32 2, %s42
    $region9: #{tpu_custom_call.1} parent=1 // pred_fallthru
      _
    // Predicated region
    $region10: #{tpu_custom_call.1} parent=1 // pred_check
      _
    $region11: #{tpu_custom_call.1} parent=1 // pred_check_branch
      %45 = sbr.rel (0) target = $region13
    $region12: #{tpu_custom_call.1} parent=1 // pred_region
      %s46 = sadd.s32 0, 0
      %p47 = scmp.lt.s32.totalorder %s46, 0
      %s48 = scalar_select %p47, %s46, 0
      %s49 = smul.u32 2, %s48
      %p50 = scmp.lt.s32.totalorder %s49, 1
      %s51 = scalar_select %p50, %s49, 1
      %s52 = smul.addr %s51, 8
      %s53 = scalar_lea.vmem %s2, %s52
      %s54 = sadd.s32 0, 0
      %p55 = scmp.lt.s32.totalorder %s54, 0
      %s56 = scalar_select %p55, %s54, 0
      %s57 = smul.u32 2, %s56
    $region13: #{tpu_custom_call.1} parent=1 // pred_fallthru
      _
    // Predicated region
    $region14: #{tpu_custom_call.1} parent=1 // pred_check
      _
    $region15: #{tpu_custom_call.1} parent=1 // pred_check_branch
      %59 = sbr.rel (0) target = $region17
    $region16: #{tpu_custom_call.1} parent=1 // pred_region
      _
    $region17: #{tpu_custom_call.1} parent=1 // pred_fallthru
      _
    %s60 = sadd.s32 0, 0
    %p61 = scmp.lt.s32.totalorder %s60, 0
    %s62 = scalar_select %p61, %s60, 0
    %s63 = smul.u32 2, %s62
    %p64 = scmp.lt.s32.totalorder %s63, 1
    %s65 = scalar_select %p64, %s63, 1
    %s66 = smul.addr %s65, 8
    %s67 = scalar_lea.vmem %s0, %s66
    %s68 = sadd.s32 0, 0
    %p69 = scmp.lt.s32.totalorder %s68, 0
    %s70 = scalar_select %p69, %s68, 0
    %s71 = smul.u32 2, %s70
    %p72 = scmp.lt.s32.totalorder %s71, 1
    %s73 = scalar_select %p72, %s71, 1
    %s74 = smul.addr %s73, 8
    %s75 = scalar_lea.vmem %s1, %s74
    %s76 = sadd.s32 0, 0
    %p77 = scmp.lt.s32.totalorder %s76, 0
    %s78 = scalar_select %p77, %s76, 0
    %s79 = smul.u32 2, %s78
    %p80 = scmp.lt.s32.totalorder %s79, 1
    %s81 = scalar_select %p80, %s79, 1
    %s82 = smul.addr %s81, 8
    %s83 = scalar_lea.vmem %s2, %s82
    %s84 = sadd.s32 0, 0
    %p85 = scmp.lt.s32.totalorder %s84, 0
    %s86 = scalar_select %p85, %s84, 0
    %s87 = smul.u32 2, %s86
    %p88 = scmp.lt.s32.totalorder %s87, 1
    %s89 = scalar_select %p88, %s87, 1
    %s90 = smul.addr %s89, 8
    %s91 = scalar_lea.vmem %s0, %s90
    %s92 = sadd.s32 0, 0
    %p93 = scmp.lt.s32.totalorder %s92, 0
    %s94 = scalar_select %p93, %s92, 0
    %s95 = smul.u32 2, %s94
    %s96 = sadd.s32 0, 0
    %p97 = scmp.lt.s32.totalorder %s96, 0
    %s98 = scalar_select %p97, %s96, 0
    %s99 = smul.u32 2, %s98
    %p100 = scmp.lt.s32.totalorder %s99, 1
    %s101 = scalar_select %p100, %s99, 1
    %s102 = smul.addr %s101, 8
    %s103 = scalar_lea.vmem %s1, %s102
    %s104 = sadd.s32 0, 0
    %p105 = scmp.lt.s32.totalorder %s104, 0
    %s106 = scalar_select %p105, %s104, 0
    %s107 = smul.u32 2, %s106
    %s108 = sadd.s32 0, 0
    %p109 = scmp.lt.s32.totalorder %s108, 0
    %s110 = scalar_select %p109, %s108, 0
    %s111 = smul.u32 2, %s110
    %p112 = scmp.lt.s32.totalorder %s111, 1
    %s113 = scalar_select %p112, %s111, 1
    %s114 = smul.addr %s113, 8
    %s115 = scalar_lea.vmem %s2, %s114
    %s116 = sadd.s32 0, 0
    %p117 = scmp.lt.s32.totalorder %s116, 0
    %s118 = scalar_select %p117, %s116, 0
    %s119 = smul.u32 2, %s118
    %p120 = scmp.eq.s32.totalorder 0, 0
    // Predicated region
    $region18: #{tpu_custom_call.1} parent=1 // pred_check
      %p121 = pneg %p120
    $region19: #{tpu_custom_call.1} parent=1 // pred_check_branch
      %123 = sbr.rel (%p121) target = $region21
    $region20: #{tpu_custom_call.1} parent=1 // pred_region
      %vm124 = vcmask 0
      %125 = vst.msk [vmem:[#allocation2] sm:$0x1] %vm124, 0.0
      %126 = vst.msk [vmem:[#allocation3] sm:$0x1] %vm124, 0.0
      %127 = vst.msk [vmem:[#allocation4] sm:$0x1] %vm124, 0.0
      %128 = vst.msk [vmem:[#allocation5] sm:$0x1] %vm124, 0.0
    $region21: #{tpu_custom_call.1} parent=1 // pred_fallthru
      _
    %v129 = vld [vmem:[%s91] sm:$0xff]
    %v130 = vld [vmem:[%s91 + $0x8] sm:$0xff]
    %v131 = vld [vmem:[%s103] sm:$0xff]
    %v132 = vld [vmem:[%s103 + $0x8] sm:$0xff]
    %v133 = vld [vmem:[%s115] sm:$0xff]
    %v134 = vld [vmem:[%s115 + $0x8] sm:$0xff]
    %v135 = vld [vmem:[%s3] sm:$0xff]
    %s136 = sadd.s32 0, 0
    %s137 = smul.u32 %s136, 16
    %v138 = vlaneseq
    %v139 = vshrl.u32 %v138, 7
    %v140 = vadd.s32 %v139, 8
    %v141 = vstv %s137
    %v142 = vadd.s32 %v141, %v139
    %v143 = vadd.s32 %v141, %v140
    %vm144 = vcmp.lt.s32.totalorder %v142, 16
    %vm145 = vcmp.lt.s32.totalorder %v143, 16
    %vm146 = vcmask 64512
    %v147 = vsel %vm146, %v129, -inf
    %148 = vmax.xlane.f32.xlu0 %v147
    %v149 = vpop.xlane.xlu0 %148
    %v150 = vsel %vm146, %v130, -inf
    %151 = vmax.xlane.f32.xlu0 %v150
    %v152 = vpop.xlane.xlu0 %151
    %v153 = vsub.f32 %v129, %v149
    %v154 = vsub.f32 %v130, %v152
    %v155 = vmul.f32 %v153, 1.442695
    %v156 = vpow.pop %v155
    %v157 = vmul.f32 %v154, 1.442695
    %v158 = vpow.pop %v157
    %v159 = vsel %vm146, %v156, 0.0
    %160 = vadd.xlane.f32.xlu0 %v159
    %v161 = vpop.xlane.xlu0 %160
    %v162 = vsel %vm146, %v158, 0.0
    %163 = vadd.xlane.f32.xlu0 %v162
    %v164 = vpop.xlane.xlu0 %163
    %v165 = vlog2.pop %v161
    %v166 = vmul.f32 %v165, 0.6931472
    %v167 = vlog2.pop %v164
    %v168 = vmul.f32 %v167, 0.6931472
    %v169 = vadd.f32 %v166, %v149
    %v170 = vadd.f32 %v168, %v152
    %v172 = vsel %vm146, %v129, 0
    %v175 = vsel %vm146, %v130, 0
    %177 = vmatprep.subr.mxu0 0.0
    %178 = vmatpush1.msra.mxu0 0.0
    %179 = vmatprep.subr.mxu0 0.0
    %180 = vmatpush1.msra.mxu0 0.0
    %181 = vmatprep.subr.mxu0 0.0
    %182 = vmatpush1.msra.mxu0 0.0
    %183 = vmatprep.subr.mxu0 0.0
    %184 = vmatpush1.msra.mxu0 0.0
    %185 = vmatprep.subr.mxu0 0.0
    %186 = vmatpush1.msra.mxu0 0.0
    %187 = vmatprep.subr.mxu0 0.0
    %188 = vmatpush1.msra.mxu0 0.0
    %189 = vmatprep.subr.mxu0 0.0
    %190 = vmatpush1.msra.mxu0 0.0
    %191 = vmatprep.subr.mxu0 0.0
    %192 = vmatpush1.msra.mxu0 0.0
    %193 = vmatprep.subr.mxu0 0.0
    %194 = vmatpush1.msra.mxu0 0.0
    %195 = vmatprep.subr.mxu0 0.0
    %196 = vmatpush1.msra.mxu0 0.0
    %197 = vmatprep.subr.mxu0 0.0
    %198 = vmatpush1.msra.mxu0 0.0
    %199 = vmatprep.subr.mxu0 0.0
    %200 = vmatpush1.msra.mxu0 0.0
    %201 = vmatprep.subr.mxu0 0.0
    %202 = vmatpush1.msra.mxu0 0.0
    %203 = vmatprep.subr.mxu0 0.0
    %204 = vmatpush1.msra.mxu0 0.0
    %205 = vmatprep.subr.mxu0 0.0
    %206 = vmatpush1.msra.mxu0 0.0
    %207 = vmatprep.subr.mxu0 0.0
    %208 = vmatpush1.msra.mxu0 %v135
    %209 = vmatprep.subr.mxu0 0.0
    %210 = vmatpush2.msra.mxu0 0.0
    %211 = vmatprep.subr.mxu0 0.0
    %212 = vmatpush2.msra.mxu0 0.0
    %213 = vmatprep.subr.mxu0 0.0
    %214 = vmatpush2.msra.mxu0 0.0
    %215 = vmatprep.subr.mxu0 0.0
    %216 = vmatpush2.msra.mxu0 0.0
    %217 = vmatprep.subr.mxu0 0.0
    %218 = vmatpush2.msra.mxu0 0.0
    %219 = vmatprep.subr.mxu0 0.0
    %220 = vmatpush2.msra.mxu0 0.0
    %221 = vmatprep.subr.mxu0 0.0
    %222 = vmatpush2.msra.mxu0 0.0
    %223 = vmatprep.subr.mxu0 0.0
    %224 = vmatpush2.msra.mxu0 0.0
    %225 = vmatprep.subr.mxu0 0.0
    %226 = vmatpush2.msra.mxu0 0.0
    %227 = vmatprep.subr.mxu0 0.0
    %228 = vmatpush2.msra.mxu0 0.0
    %229 = vmatprep.subr.mxu0 0.0
    %230 = vmatpush2.msra.mxu0 0.0
    %231 = vmatprep.subr.mxu0 0.0
    %232 = vmatpush2.msra.mxu0 0.0
    %233 = vmatprep.subr.mxu0 0.0
    %234 = vmatpush2.msra.mxu0 0.0
    %235 = vmatprep.subr.mxu0 0.0
    %236 = vmatpush2.msra.mxu0 0.0
    %237 = vmatprep.subr.mxu0 0.0
    %238 = vmatpush2.msra.mxu0 0.0
    %239 = vmatprep.subr.mxu0 0.0
    %240 = vmatpush2.msra.mxu0 0.0
    %241 = vmatprep.mubr.f32.mxu0 0.0
    %242 = vmatmul.mubr.f32.gmra.mxu0 %v172
    %v243 = vpop.f32.mrf.mxu0
    %v244 = vadd.f32 0.0, %v243
    %v245 = vpop.f32.mrf.mxu0
    %246 = vmatprep.mubr.f32.mxu0 0.0
    %247 = vmatmul.mubr.f32.gmra.mxu0 %v175
    %v248 = vpop.f32.mrf.mxu0
    %v249 = vadd.f32 0.0, %v248
    %v250 = vpop.f32.mrf.mxu0
    %251 = vdwg.mxu0
    %v252 = vlaneseq
    %v253 = vand.u32 %v252, 127
    %254 = vset.pattern.permute.xlu0 0
    %255 = vperm.xlu0 %254, %v131
    %v256 = vpop.permute.xlu0 %255
    %257 = vset.pattern.permute.xlu0 0
    %258 = vperm.xlu0 %257, %v132
    %v259 = vpop.permute.xlu0 %258
    %vm260 = vcmp.eq.s32.totalorder %v253, %v256
    %vm261 = vcmp.eq.s32.totalorder %v253, %v259
    %v262 = vsel %vm260, %v129, 0.0
    %v263 = vsel %vm261, %v130, 0.0
    %v264 = vsel %vm146, %v262, 0.0
    %265 = vadd.xlane.f32.xlu0 %v264
    %v266 = vpop.xlane.xlu0 %265
    %v267 = vsel %vm146, %v263, 0.0
    %268 = vadd.xlane.f32.xlu0 %v267
    %v269 = vpop.xlane.xlu0 %268
    %v270 = vmul.f32 %v133, %v133
    %v271 = vmul.f32 %v134, %v134
    %v272 = vsub.f32 %v169, %v266
    %v273 = vsub.f32 %v170, %v269
    %v274 = vmul.f32 %v270, %v272
    %v275 = vmul.f32 %v271, %v273
    %v276 = vld [vmem:[#allocation2] sm:$0x1]
    %v277 = vsel %vm144, %v169, 0.0
    %v278 = vsel %vm145, %v170, 0.0
    %vm279 = vcmask 7168
    %v280 = vsel %vm279, %v277, 0.0
    %v281 = vsel %vm279, %v278, 0.0
    %v282 = vadd.f32 %v280, %v281
    %283 = vadd.xlane.f32.xlu0 %v282
    %v284 = vpop.xlane.xlu0 %283
    %v285 = vrot.slane %v284, 4
    %v286 = vadd.f32 %v284, %v285
    %v287 = vrot.slane %v286, 2
    %v288 = vadd.f32 %v286, %v287
    %v289 = vrot.slane %v288, 1
    %v290 = vadd.f32 %v288, %v289
    %s291 = vtos %v290
    %v292 = vstv %s291
    %v293 = vadd.f32 %v276, %v292
    %vm294 = vcmask 0
    %295 = vst.msk [vmem:[#allocation2] sm:$0x1] %vm294, %v293
    %v296 = vld [vmem:[#allocation3] sm:$0x1]
    %v297 = vsel %vm144, %v244, 0.0
    %v298 = vsel %vm145, %v249, 0.0
    %v299 = vsel %vm279, %v297, 0.0
    %v300 = vsel %vm279, %v298, 0.0
    %v301 = vadd.f32 %v299, %v300
    %302 = vadd.xlane.f32.xlu0 %v301
    %v303 = vpop.xlane.xlu0 %302
    %v304 = vrot.slane %v303, 4
    %v305 = vadd.f32 %v303, %v304
    %v306 = vrot.slane %v305, 2
    %v307 = vadd.f32 %v305, %v306
    %v308 = vrot.slane %v307, 1
    %v309 = vadd.f32 %v307, %v308
    %s310 = vtos %v309
    %v311 = vstv %s310
    %v312 = vadd.f32 %v296, %v311
    %313 = vst.msk [vmem:[#allocation3] sm:$0x1] %vm294, %v312
    %v314 = vld [vmem:[#allocation4] sm:$0x1]
    %v315 = vsel %vm144, %v274, 0.0
    %v316 = vsel %vm145, %v275, 0.0
    %v317 = vsel %vm279, %v315, 0.0
    %v318 = vsel %vm279, %v316, 0.0
    %v319 = vadd.f32 %v317, %v318
    %320 = vadd.xlane.f32.xlu0 %v319
    %v321 = vpop.xlane.xlu0 %320
    %v322 = vrot.slane %v321, 4
    %v323 = vadd.f32 %v321, %v322
    %v324 = vrot.slane %v323, 2
    %v325 = vadd.f32 %v323, %v324
    %v326 = vrot.slane %v325, 1
    %v327 = vadd.f32 %v325, %v326
    %s328 = vtos %v327
    %v329 = vstv %s328
    %v330 = vadd.f32 %v314, %v329
    %331 = vst.msk [vmem:[#allocation4] sm:$0x1] %vm294, %v330
    %v332 = vld [vmem:[#allocation5] sm:$0x1]
    %v333 = vsel %vm144, %v133, 0.0
    %v334 = vsel %vm145, %v134, 0.0
    %v335 = vsel %vm279, %v333, 0.0
    %v336 = vsel %vm279, %v334, 0.0
    %v337 = vadd.f32 %v335, %v336
    %338 = vadd.xlane.f32.xlu0 %v337
    %v339 = vpop.xlane.xlu0 %338
    %v340 = vrot.slane %v339, 4
    %v341 = vadd.f32 %v339, %v340
    %v342 = vrot.slane %v341, 2
    %v343 = vadd.f32 %v341, %v342
    %v344 = vrot.slane %v343, 1
    %v345 = vadd.f32 %v343, %v344
    %s346 = vtos %v345
    %v347 = vstv %s346
    %v348 = vadd.f32 %v332, %v347
    %349 = vst.msk [vmem:[#allocation5] sm:$0x1] %vm294, %v348
    // Predicated region
    $region22: #{tpu_custom_call.1} parent=1 // pred_check
      %p350 = pneg %p120
    $region23: #{tpu_custom_call.1} parent=1 // pred_check_branch
      %352 = sbr.rel (%p350) target = $region25
    $region24: #{tpu_custom_call.1} parent=1 // pred_region
      %v353 = vld [vmem:[#allocation2] sm:$0x1]
      %354 = vst.msk [vmem:[#allocation6] sm:$0x1] %vm294, %v353
      %v355 = vld [vmem:[#allocation3] sm:$0x1]
      %356 = vst.msk [vmem:[#allocation8] sm:$0x1] %vm294, %v355
      %v357 = vld [vmem:[#allocation4] sm:$0x1]
      %358 = vst.msk [vmem:[#allocation10] sm:$0x1] %vm294, %v357
      %v359 = vld [vmem:[#allocation5] sm:$0x1]
      %360 = vst.msk [vmem:[#allocation11] sm:$0x1] %vm294, %v359
    $region25: #{tpu_custom_call.1} parent=1 // pred_fallthru
      _
    // Predicated region
    $region26: #{tpu_custom_call.1} parent=1 // pred_check
      _
    $region27: #{tpu_custom_call.1} parent=1 // pred_check_branch
      %362 = sbr.rel (0) target = $region29
    $region28: #{tpu_custom_call.1} parent=1 // pred_region
      %s364 = ssub.s32 16, 16
      %365 = vsyncadd [#allocation7], %s364
      %s367 = sshll.u32 [#allocation6], 4
      %s368 = int_to_ptr.vmem [resolvable:$true] %s367
      %370 = dma.vmem_to_hbm [thread:$0]  %s368, 16, %s4, [#allocation7]
    $region29: #{tpu_custom_call.1} parent=1 // pred_fallthru
      _
    // Predicated region
    $region30: #{tpu_custom_call.1} parent=1 // pred_check
      _
    $region31: #{tpu_custom_call.1} parent=1 // pred_check_branch
      %372 = sbr.rel (0) target = $region33
    $region32: #{tpu_custom_call.1} parent=1 // pred_region
      %s374 = ssub.s32 16, 16
      %375 = vsyncadd [#allocation9], %s374
      %s377 = sshll.u32 [#allocation8], 4
      %s378 = int_to_ptr.vmem [resolvable:$true] %s377
      %380 = dma.vmem_to_hbm [thread:$0]  %s378, 16, %s5, [#allocation9]
    $region33: #{tpu_custom_call.1} parent=1 // pred_fallthru
      _
    // Predicated region
    $region34: #{tpu_custom_call.1} parent=1 // pred_check
      _
    $region35: #{tpu_custom_call.1} parent=1 // pred_check_branch
      %382 = sbr.rel (0) target = $region37
    $region36: #{tpu_custom_call.1} parent=1 // pred_region
      %s384 = ssub.s32 16, 16
      %385 = vsyncadd [#allocation9], %s384
      %s387 = sshll.u32 [#allocation10], 4
      %s388 = int_to_ptr.vmem [resolvable:$true] %s387
      %390 = dma.vmem_to_hbm [thread:$0]  %s388, 16, %s6, [#allocation9]
    $region37: #{tpu_custom_call.1} parent=1 // pred_fallthru
      _
    // Predicated region
    $region38: #{tpu_custom_call.1} parent=1 // pred_check
      _
    $region39: #{tpu_custom_call.1} parent=1 // pred_check_branch
      %392 = sbr.rel (0) target = $region41
    $region40: #{tpu_custom_call.1} parent=1 // pred_region
      %s394 = ssub.s32 16, 16
      %395 = vsyncadd [#allocation12], %s394
      %s397 = sshll.u32 [#allocation11], 4
      %s398 = int_to_ptr.vmem [resolvable:$true] %s397
      %400 = dma.vmem_to_hbm [thread:$0]  %s398, 16, %s7, [#allocation12]
    $region41: #{tpu_custom_call.1} parent=1 // pred_fallthru
      _
    // Predicated region
    $region42: #{tpu_custom_call.1} parent=1 // pred_check
      _
    $region43: #{tpu_custom_call.1} parent=1 // pred_check_branch
      %402 = sbr.rel (0) target = $region45
    $region44: #{tpu_custom_call.1} parent=1 // pred_region
      %403 = dma.done [#allocation7], 16
    $region45: #{tpu_custom_call.1} parent=1 // pred_fallthru
      _
    // Predicated region
    $region46: #{tpu_custom_call.1} parent=1 // pred_check
      _
    $region47: #{tpu_custom_call.1} parent=1 // pred_check_branch
      %405 = sbr.rel (0) target = $region49
    $region48: #{tpu_custom_call.1} parent=1 // pred_region
      %406 = dma.done [#allocation9], 16
    $region49: #{tpu_custom_call.1} parent=1 // pred_fallthru
      _
    // Predicated region
    $region50: #{tpu_custom_call.1} parent=1 // pred_check
      _
    $region51: #{tpu_custom_call.1} parent=1 // pred_check_branch
      %408 = sbr.rel (0) target = $region53
    $region52: #{tpu_custom_call.1} parent=1 // pred_region
      %409 = dma.done [#allocation9], 16
    $region53: #{tpu_custom_call.1} parent=1 // pred_fallthru
      _
    // Predicated region
    $region54: #{tpu_custom_call.1} parent=1 // pred_check
      _
    $region55: #{tpu_custom_call.1} parent=1 // pred_check_branch
      %411 = sbr.rel (0) target = $region57
    $region56: #{tpu_custom_call.1} parent=1 // pred_region
      %412 = dma.done [#allocation12], 16
    $region57: #{tpu_custom_call.1} parent=1 // pred_fallthru
      _
    %413 = vsyncpa [#allocation7], 1
    %414 = vsyncpa [#allocation9], 1
    %415 = vsyncpa [#allocation12], 1

</llo_original>
